<compile_context>
chip_gen: v7x
topology: tpu7x:2x2x1
jax: 0.10.0
libtpu: 0.0.40
codegen_flags: <defaults>
</compile_context>

<pallas_src>
import functools
import math

import jax
import jax.numpy as jnp
from jax.experimental import pallas as pl
from jax.experimental.pallas import tpu as pltpu

_LANES = 128
_SUBLANES = 8                        # f32 sublanes; shape of each partial-sum vreg
_MAX_TM = 2048                       # rows per grid block (>=512 ~ 85% HBM roofline)
_INPUT_VMEM_BUDGET = 8 * 1024 * 1024  # 2 inputs x 2 double-buffers
_JAX_FALLBACK_ELEMS = 1024           # below one (8,128) vreg: plain JAX is faster
_HALF_LOG_2PI = 0.5 * math.log(2.0 * math.pi)


def _round_up(x, m):
    return ((x + m - 1) // m) * m


def _cdiv(a, b):
    return -(-a // b)


def _min_sublanes(dtype):
    # Native tiling: (8,128) f32 / (16,128) bf16 / (32,128) int8-fp8.
    return max(_SUBLANES, 32 // jnp.dtype(dtype).itemsize)


def _elementwise_loss(p, t, loss_name, binary_input):
    """Per-element loss term in f32 (matches torch defaults)."""
    if loss_name == "BCE":
        if binary_input:
            # Targets are exactly {0,1} after (GT > 0): one log per element
            # instead of two (halves EUP/transcendental load; numerically
            # identical to the two-log form for exact 0/1 targets).
            sel = jnp.where(t > 0.0, p, 1.0 - p)
            return -jnp.maximum(jnp.log(sel), -100.0)
        log_p = jnp.maximum(jnp.log(p), -100.0)
        log_1mp = jnp.maximum(jnp.log(1.0 - p), -100.0)
        return -(t * log_p + (1.0 - t) * log_1mp)

    if binary_input:
        t = (t > 0.0).astype(jnp.float32)

    if loss_name == "MSE":
        d = p - t
        return d * d

    if loss_name == "PoissonNLL":
        # torch.nn.PoissonNLLLoss(log_input=False, full=True, eps=1e-8):
        #   loss = input - target*log(input + eps) + stirling(target)
        #   stirling(t) = t*log(t) - t + 0.5*log(2*pi*t)          (only t > 1)
        #               = (t + 0.5)*log(t) - t + 0.5*log(2*pi)    (1 log, not 2)
        eps = 1e-8
        base = p - t * jnp.log(p + eps)
        safe_t = jnp.maximum(t, 1.0)            # avoid log(0) in masked branch
        stirling = (safe_t + 0.5) * jnp.log(safe_t) - safe_t + _HALF_LOG_2PI
        return base + jnp.where(t > 1.0, stirling, 0.0)

    raise ValueError(f"unknown loss {loss_name}")


def _reduce_block(term, tm):
    """(tm,128) f32 -> (8,128) partial sum using independent VPU accumulator chains."""
    n = tm // _SUBLANES
    u = 1
    for cand in (8, 4, 2):
        if n % cand == 0:
            u = cand
            break
    r = term.reshape(n // u, u, _SUBLANES, _LANES)
    # axis-0 sum: u independent (8,128) accumulators (fills the 4 VALU slots),
    # then a short u-deep combine.  No XLU cross-lane reduce anywhere.
    return jnp.sum(jnp.sum(r, axis=0), axis=0)


def _loss_partial_kernel(preds_ref, tgt_ref, out_ref, *, loss_name,
                         binary_input, tm, last_valid, needs_mask):
    """Writes one lane-dense (8,128) partial-sum block per grid step."""
    p = preds_ref[...].astype(jnp.float32)
    t = tgt_ref[...].astype(jnp.float32)
    term = _elementwise_loss(p, t, loss_name, binary_input)

    if needs_mask:
        i = pl.program_id(0)
        last = pl.num_programs(0) - 1

        @pl.when(i != last)
        def _():
            out_ref[...] = _reduce_block(term, tm)

        @pl.when(i == last)
        def _():
            # Only the final block carries padded / OOB rows.  Mask with a
            # block-local index (no int32-overflow risk on huge tensors; all
            # non-final blocks skip the per-element mask work entirely).
            row = jax.lax.broadcasted_iota(jnp.int32, (tm, _LANES), 0)
            lane = jax.lax.broadcasted_iota(jnp.int32, (tm, _LANES), 1)
            keep = (row * _LANES + lane) < last_valid
            out_ref[...] = _reduce_block(jnp.where(keep, term, 0.0), tm)
    else:
        out_ref[...] = _reduce_block(term, tm)


@functools.partial(jax.jit, static_argnames=("loss_name", "binary_input"))
def _pallas_loss_mean(preds, targets, *, loss_name, binary_input):
    """Mean-reduced loss over the whole tensor."""
    total = preds.size

    def jax_fallback():
        term = _elementwise_loss(preds.reshape(-1).astype(jnp.float32),
                                 targets.reshape(-1).astype(jnp.float32),
                                 loss_name, binary_input)
        return jnp.sum(term, dtype=jnp.float32) / jnp.float32(total)

    rows = _cdiv(total, _LANES)
    sub = max(_min_sublanes(preds.dtype), _min_sublanes(targets.dtype))
    if total < _JAX_FALLBACK_ELEMS or rows < sub:
        return jax_fallback()

    p1 = preds.reshape(-1)
    t1 = targets.reshape(-1)
    rem = total % _LANES
    if rem:
        # Lane-misaligned element count: pad by <128 elements so the [rows,128]
        # reshape is legal.  This is the only case paying an extra HBM
        # round-trip; lane-aligned tensors (common NCHW) reshape for free.
        # TODO(synk): a manual-DMA (memory_space=pl.ANY) path could stream the
        # misaligned tail without this copy.
        p1 = jnp.pad(p1, (0, _LANES - rem))
        t1 = jnp.pad(t1, (0, _LANES - rem))
    p2 = p1.reshape(rows, _LANES)
    t2 = t1.reshape(rows, _LANES)

    # Row tile: large enough to amortize ~0.35us/step pipeline overhead, small
    # enough that double-buffered inputs + f32 intermediates fit comfortably in
    # 32 MiB scoped VMEM on every generation (incl. v7x's 64 MiB physical), and
    # never larger than needed for >=2 grid blocks (feeds both v7x TCs).
    bytes_per_row = _LANES * (p2.dtype.itemsize + t2.dtype.itemsize) * 2
    tm_cap = max(sub, (_INPUT_VMEM_BUDGET // bytes_per_row) // sub * sub)
    tm_cap = min(tm_cap, _MAX_TM)
    half_rows = _round_up(_cdiv(rows, 2), sub)
    tm = min(tm_cap, max(sub, half_rows))
    grid = _cdiv(rows, tm)

    last_valid = total - (grid - 1) * tm * _LANES   # valid elems in final block
    needs_mask = (grid * tm * _LANES) != total

    kernel = functools.partial(
        _loss_partial_kernel, loss_name=loss_name, binary_input=binary_input,
        tm=tm, last_valid=last_valid, needs_mask=needs_mask)

    transc = {"BCE": 1 if binary_input else 2, "MSE": 0, "PoissonNLL": 2}[loss_name]
    flops = {"BCE": 4, "MSE": 3, "PoissonNLL": 9}[loss_name]
    cost = pl.CostEstimate(
        flops=flops * total,
        transcendentals=transc * total,
        bytes_accessed=total * (preds.dtype.itemsize + targets.dtype.itemsize)
        + grid * _SUBLANES * _LANES * 4)

    partials = pl.pallas_call(
        kernel,
        out_shape=jax.ShapeDtypeStruct((grid * _SUBLANES, _LANES), jnp.float32),
        grid_spec=pltpu.PrefetchScalarGridSpec(
            num_scalar_prefetch=0,
            grid=(grid,),
            in_specs=[
                pl.BlockSpec((tm, _LANES), lambda i: (i, 0)),
                pl.BlockSpec((tm, _LANES), lambda i: (i, 0)),
            ],
            # Each grid step owns its own lane-dense (8,128) partial-sum block,
            # so the single grid axis is truly parallel (both TCs on v7x).
            out_specs=pl.BlockSpec((_SUBLANES, _LANES), lambda i: (i, 0)),
        ),
        compiler_params=pltpu.CompilerParams(
            dimension_semantics=("parallel",),
            vmem_limit_bytes=32 << 20,
        ),
        cost_estimate=cost,
    )(p2, t2)

    # Final cheap reduction + mean in plain JAX (partials are tiny vs inputs).
    return jnp.sum(partials, dtype=jnp.float32) / jnp.float32(total)


class PallasLoss:
    """JAX/Pallas re-implementation of util.losses.Loss."""

    def __init__(self, config):
        if config["model_type"] == "Decompression masking network":
            self.binary_input = True
            self.loss_name = "BCE"
        elif config["model_type"] == "Value reconstruction network":
            self.binary_input = False
            if config["imaging_platform"] == "CODEX":
                self.loss_name = "MSE"
            elif config["imaging_platform"] == "MIBI":
                self.loss_name = "PoissonNLL"
            else:
                raise ValueError("unknown imaging_platform")
        else:
            raise ValueError("unknown model_type")

    def get_loss_name(self):
        return self.loss_name

    def __call__(self, outputs, inputs):
        preds = outputs["preds"]
        gt = inputs["GT_singles"]
        val = _pallas_loss_mean(preds, gt, loss_name=self.loss_name,
                                binary_input=self.binary_input)
        return {f"loss_{self.loss_name}": val}


def _reference_loss(preds, gt, loss_name, binary_input):
    """Pure-JAX reference using the literal torch formulas (un-refactored)."""
    p = preds.astype(jnp.float32).reshape(-1)
    t = gt.astype(jnp.float32).reshape(-1)
    if binary_input:
        t = (t > 0.0).astype(jnp.float32)
    if loss_name == "BCE":
        term = -(t * jnp.maximum(jnp.log(p), -100.0)
                 + (1.0 - t) * jnp.maximum(jnp.log(1.0 - p), -100.0))
    elif loss_name == "MSE":
        term = (p - t) ** 2
    else:  # PoissonNLL
        eps = 1e-8
        safe_t = jnp.maximum(t, 1.0)
        stirling = (safe_t * jnp.log(safe_t) - safe_t
                    + 0.5 * jnp.log(2.0 * jnp.pi * safe_t))
        term = p - t * jnp.log(p + eps) + jnp.where(t > 1.0, stirling, 0.0)
    return jnp.mean(term)


if __name__ == "__main__":
    key = jax.random.PRNGKey(0)

    configs = [
        {"model_type": "Decompression masking network"},
        {"model_type": "Value reconstruction network",
         "imaging_platform": "CODEX"},
        {"model_type": "Value reconstruction network",
         "imaging_platform": "MIBI"},
    ]

    # (2,4,16,16): lane-aligned NCHW, 2-block Pallas path.
    # (1,3,10,10): tiny -> plain-JAX fallback.
    # (2,3,23,23): lane-misaligned -> minimal pad + masked final ragged block.
    # (2,8,96,96): larger aligned tensor, multi-row-tile grid.
    shapes = [(2, 4, 16, 16), (1, 3, 10, 10), (2, 3, 23, 23), (2, 8, 96, 96)]

    ok = True
    for shape in shapes:
        k1, k2, key = jax.random.split(key, 3)
        # Predictions in (0,1): valid for BCE / positive for Poisson.
        preds = jax.nn.sigmoid(jax.random.normal(k1, shape, dtype=jnp.float32))
        # Ground-truth "singles": non-negative count-like values with zeros.
        gt = jnp.maximum(
            jax.random.normal(k2, shape, dtype=jnp.float32) * 2.0, 0.0)

        outputs = {"preds": preds}
        inputs = {"GT_singles": gt}

        for cfg in configs:
            loss_mod = PallasLoss(cfg)
            name = loss_mod.get_loss_name()
            val = jax.block_until_ready(loss_mod(outputs, inputs)[f"loss_{name}"])
            ref = _reference_loss(preds, gt, name, loss_mod.binary_input)
            if not jnp.allclose(val, ref, rtol=1e-5, atol=1e-5):
                ok = False
                print(f"MISMATCH shape={shape} loss={name}: {val} vs {ref}")

    if ok:
        print("KERNEL_OK")
</pallas_src>

<mosaic_0001>
module attributes {stable_mosaic.version = 11 : i64} {
  func.func @_loss_partial_kernel(%arg0: i32, %arg1: memref<8x128xf32, #tpu.memory_space<vmem>>, %arg2: memref<8x128xf32, #tpu.memory_space<vmem>>, %arg3: memref<8x128xf32, #tpu.memory_space<vmem>>) attributes {dimension_semantics = [#tpu.dimension_semantics<parallel>], iteration_bounds = array<i64: 2>, scalar_prefetch = 0 : i64, scratch_operands = 0 : i64, tpu.core_type = #tpu.core_type<tc>, window_params = [{transform_indices = @transform_0, window_bounds = array<i64: 8, 128>}, {transform_indices = @transform_1, window_bounds = array<i64: 8, 128>}, {transform_indices = @transform_2, window_bounds = array<i64: 8, 128>}]} {
    %c0 = arith.constant 0 : index
    %c0_0 = arith.constant 0 : index
    %0 = vector.load %arg1[%c0, %c0_0] : memref<8x128xf32, #tpu.memory_space<vmem>>, vector<8x128xf32>
    %c0_1 = arith.constant 0 : index
    %c0_2 = arith.constant 0 : index
    %1 = vector.load %arg2[%c0_1, %c0_2] : memref<8x128xf32, #tpu.memory_space<vmem>>, vector<8x128xf32>
    %cst = arith.constant 0.000000e+00 : f32
    %2 = vector.broadcast %cst : f32 to vector<8x128xf32>
    %3 = arith.cmpf ogt, %1, %2 : vector<8x128xf32>
    %cst_3 = arith.constant 1.000000e+00 : f32
    %4 = vector.broadcast %cst_3 : f32 to vector<8x128xf32>
    %5 = arith.subf %4, %0 : vector<8x128xf32>
    %6 = arith.select %3, %0, %5 : vector<8x128xi1>, vector<8x128xf32>
    %7 = math.log %6 : vector<8x128xf32>
    %cst_4 = arith.constant -1.000000e+02 : f32
    %8 = vector.broadcast %cst_4 : f32 to vector<8x128xf32>
    %9 = arith.maximumf %7, %8 : vector<8x128xf32>
    %cst_5 = arith.constant 0.000000e+00 : f32
    %10 = vector.broadcast %cst_5 : f32 to vector<8x128xf32>
    %11 = arith.subf %10, %9 : vector<8x128xf32>
    %12 = vector.shape_cast %11 : vector<8x128xf32> to vector<1x1x8x128xf32>
    %cst_6 = arith.constant dense<0.000000e+00> : vector<1x8x128xf32>
    %13 = vector.multi_reduction <add>, %12, %cst_6 [0] : vector<1x1x8x128xf32> to vector<1x8x128xf32>
    %cst_7 = arith.constant dense<0.000000e+00> : vector<8x128xf32>
    %14 = vector.multi_reduction <add>, %13, %cst_7 [0] : vector<1x8x128xf32> to vector<8x128xf32>
    %c0_8 = arith.constant 0 : index
    %c0_9 = arith.constant 0 : index
    %15 = vector.load %arg3[%c0_8, %c0_9] : memref<8x128xf32, #tpu.memory_space<vmem>>, vector<8x128xf32>
    tpu.vector_store %arg3[%c0_8, %c0_9], %14 {strides = array<i32>} : memref<8x128xf32, #tpu.memory_space<vmem>>, vector<8x128xf32>,
    return
  }
  func.func @transform_0(%arg0: i32) -> (i32, i32) {
    %c0_i32 = arith.constant 0 : i32
    %c0_i32_0 = arith.constant 0 : i32
    return %arg0, %c0_i32 : i32, i32
  }
  func.func @transform_1(%arg0: i32) -> (i32, i32) {
    %c0_i32 = arith.constant 0 : i32
    %c0_i32_0 = arith.constant 0 : i32
    return %arg0, %c0_i32 : i32, i32
  }
  func.func @transform_2(%arg0: i32) -> (i32, i32) {
    %c0_i32 = arith.constant 0 : i32
    %c0_i32_0 = arith.constant 0 : i32
    return %arg0, %c0_i32 : i32, i32
  }
}

</mosaic_0001>

<llo_original>
// kernel: _pallas_loss_mean.1
$region0: #{_pallas_loss_mean.1}
  #allocation0 [shape = 'u32[]', space=smem, size = 0x4, offset = 0x4, fixed_abs, tag = 'smem constant byte address 0x4 - core index']
  #allocation1 [shape = 'u32[144,128]{1,0:T(1,128)}', space=vmem, size = 0x12000, scoped, tag = 'internal scratch']
  %s0 = inlined_call_operand.vmem [shape: f32[16,128], index: 0, kind: input, shape index: {}]
  %s1 = inlined_call_operand.vmem [shape: f32[16,128], index: 1, kind: input, shape index: {}]
  %s2 = inlined_call_operand.vmem [shape: f32[16,128], index: 2, kind: output, shape index: {}]
  %s3 = sld [smem:[#allocation0]]
  $region41: #{_pallas_loss_mean.1} parent=0
    _
  %s5 = ssub.s32 1, %s3
  %s6 = scalar_select 0, %s5, %s3
  loop: start=0, step=1, limit=4
  $region2: #{_pallas_loss_mean.1} parent=0 // loop_pre_header
    _
  $region3: #{_pallas_loss_mean.1} parent=0 // loop_header
    %s8 = sphi 0, %s12
    %p9 = scmp.ge.s32.totalorder %s8, 4
    %s18 = sphi 0, %s20
    %s21 = sphi 0, %s18
    %s22 = sphi 0, %s21
    %s38 = sphi 0, %s22
    %s44 = sphi 0, %s46
    %s47 = sphi 0, %s44
    %s48 = sphi 0, %s47
    %s64 = sphi 0, %s48
    %s70 = sphi 0, %s72
    %s73 = sphi 0, %s70
    %s74 = sphi 0, %s73
    %s90 = sphi 0, %s74
  $region4: #{_pallas_loss_mean.1} parent=0 // loop_header_branch
    %11 = sbr.rel (%p9) target = $region8
  $region5: #{_pallas_loss_mean.1} parent=0 // loop_body
    %s13 = ssub.s32 %s8, 1
    %s14 = ssub.s32 %s8, 2
    %s15 = sadd.s32 %s8, 1
    %s16 = ssub.s32 %s8, %s15
    %p17 = scmp.eq.s32.totalorder %s16, 0
    %s19 = sadd.s32 %s18, 1
    %s20 = scalar_select %p17, %s18, %s19
    %p23 = pneg %p17
    %p24 = scmp.eq.s32.totalorder %s8, 1
    %p25 = por %p23, %p24
    %p26 = scmp.ne.s32.totalorder %s18, %s21
    %p27 = scmp.eq.s32.totalorder %s8, 0
    %p28 = por %p26, %p27
    %p29 = scmp.ne.s32.totalorder %s18, %s21
    %p30 = scmp.eq.s32.totalorder %s13, 1
    %p31 = por %p29, %p30
    %p32 = scmp.ne.s32.totalorder %s21, %s22
    %p33 = scmp.eq.s32.totalorder %s13, 0
    %p34 = por %p32, %p33
    %p35 = scmp.ne.s32.totalorder %s21, %s22
    %p36 = scmp.eq.s32.totalorder %s14, 1
    %p37 = por %p35, %p36
    %p39 = scmp.ne.s32.totalorder %s22, %s38
    %p40 = scmp.eq.s32.totalorder %s14, 0
    %p41 = por %p39, %p40
    %s42 = ssub.s32 %s8, %s15
    %p43 = scmp.eq.s32.totalorder %s42, 0
    %s45 = sadd.s32 %s44, 1
    %s46 = scalar_select %p43, %s44, %s45
    %p49 = pneg %p43
    %p50 = scmp.eq.s32.totalorder %s8, 1
    %p51 = por %p49, %p50
    %p52 = scmp.ne.s32.totalorder %s44, %s47
    %p53 = scmp.eq.s32.totalorder %s8, 0
    %p54 = por %p52, %p53
    %p55 = scmp.ne.s32.totalorder %s44, %s47
    %p56 = scmp.eq.s32.totalorder %s13, 1
    %p57 = por %p55, %p56
    %p58 = scmp.ne.s32.totalorder %s47, %s48
    %p59 = scmp.eq.s32.totalorder %s13, 0
    %p60 = por %p58, %p59
    %p61 = scmp.ne.s32.totalorder %s47, %s48
    %p62 = scmp.eq.s32.totalorder %s14, 1
    %p63 = por %p61, %p62
    %p65 = scmp.ne.s32.totalorder %s48, %s64
    %p66 = scmp.eq.s32.totalorder %s14, 0
    %p67 = por %p65, %p66
    %s68 = ssub.s32 %s8, %s15
    %p69 = scmp.eq.s32.totalorder %s68, 0
    %s71 = sadd.s32 %s70, 1
    %s72 = scalar_select %p69, %s70, %s71
    %p75 = pneg %p69
    %p76 = scmp.eq.s32.totalorder %s8, 1
    %p77 = por %p75, %p76
    %p78 = scmp.ne.s32.totalorder %s70, %s73
    %p79 = scmp.eq.s32.totalorder %s8, 0
    %p80 = por %p78, %p79
    %p81 = scmp.ne.s32.totalorder %s70, %s73
    %p82 = scmp.eq.s32.totalorder %s13, 1
    %p83 = por %p81, %p82
    %p84 = scmp.ne.s32.totalorder %s73, %s74
    %p85 = scmp.eq.s32.totalorder %s13, 0
    %p86 = por %p84, %p85
    %p87 = scmp.ne.s32.totalorder %s73, %s74
    %p88 = scmp.eq.s32.totalorder %s14, 1
    %p89 = por %p87, %p88
    %p91 = scmp.ne.s32.totalorder %s74, %s90
    %p92 = scmp.eq.s32.totalorder %s14, 0
    %p93 = por %p91, %p92
    %p94 = scmp.le.s32.totalorder 1, %s8
    %p95 = scmp.lt.s32.totalorder %s8, 3
    %p96 = pnand %p94, %p95
    %p97 = pneg %p96
    // Predicated region
    $region9: #{_pallas_loss_mean.1} parent=5 // pred_check
      _
    $region10: #{_pallas_loss_mean.1} parent=5 // pred_check_branch
      %99 = sbr.rel (%p96) target = $region12
    $region11: #{_pallas_loss_mean.1} parent=5 // pred_region
      %s100 = ssub.s32 %s8, 1
    $region12: #{_pallas_loss_mean.1} parent=5 // pred_fallthru
      _
    %p101 = scmp.lt.s32.totalorder %s8, 2
    // Predicated region
    $region13: #{_pallas_loss_mean.1} parent=5 // pred_check
      %p102 = pneg %p101
    $region14: #{_pallas_loss_mean.1} parent=5 // pred_check_branch
      %104 = sbr.rel (%p102) target = $region16
    $region15: #{_pallas_loss_mean.1} parent=5 // pred_region
      // Predicated region
      $region17: #{_pallas_loss_mean.1} parent=15 // pred_check
        %p105 = pneg %p28
      $region18: #{_pallas_loss_mean.1} parent=15 // pred_check_branch
        %107 = sbr.rel (%p105) target = $region20
      $region19: #{_pallas_loss_mean.1} parent=15 // pred_region
        %p108 = scmp.lt.s32.totalorder %s8, 1
        %s109 = scalar_select %p108, %s8, 1
        %s110 = smul.addr %s109, 8
        %s111 = scalar_lea.vmem %s0, %s110
      $region20: #{_pallas_loss_mean.1} parent=15 // pred_fallthru
        _
      // Predicated region
      $region21: #{_pallas_loss_mean.1} parent=15 // pred_check
        %p112 = pneg %p54
      $region22: #{_pallas_loss_mean.1} parent=15 // pred_check_branch
        %114 = sbr.rel (%p112) target = $region24
      $region23: #{_pallas_loss_mean.1} parent=15 // pred_region
        %p115 = scmp.lt.s32.totalorder %s8, 1
        %s116 = scalar_select %p115, %s8, 1
        %s117 = smul.addr %s116, 8
        %s118 = scalar_lea.vmem %s1, %s117
      $region24: #{_pallas_loss_mean.1} parent=15 // pred_fallthru
        _
    $region16: #{_pallas_loss_mean.1} parent=5 // pred_fallthru
      _
    %p119 = scmp.le.s32.totalorder 1, %s8
    %p120 = scmp.lt.s32.totalorder %s8, 3
    %p121 = pnand %p119, %p120
    %p122 = pneg %p121
    // Predicated region
    $region25: #{_pallas_loss_mean.1} parent=5 // pred_check
      _
    $region26: #{_pallas_loss_mean.1} parent=5 // pred_check_branch
      %124 = sbr.rel (%p121) target = $region28
    $region27: #{_pallas_loss_mean.1} parent=5 // pred_region
      %s125 = ssub.s32 %s8, 1
      %p126 = scmp.lt.s32.totalorder %s13, 1
      %s127 = scalar_select %p126, %s13, 1
      %s128 = smul.addr %s127, 8
      %s129 = scalar_lea.vmem %s0, %s128
      %p130 = pneg %p34
      %p131 = pneg %p31
      %p132 = scmp.lt.s32.totalorder %s13, 1
      %s133 = scalar_select %p132, %s13, 1
      %s134 = smul.addr %s133, 8
      %s135 = scalar_lea.vmem %s1, %s134
      %p136 = pneg %p60
      %p137 = pneg %p57
      %p138 = pneg %p86
      %p139 = pneg %p83
      %p140 = scmp.lt.s32.totalorder %s13, 1
      %s141 = scalar_select %p140, %s13, 1
      %s142 = smul.addr %s141, 8
      %s143 = scalar_lea.vmem %s2, %s142
      %p144 = scmp.lt.s32.totalorder %s13, 1
      %s145 = scalar_select %p144, %s13, 1
      %s146 = smul.addr %s145, 8
      %s147 = scalar_lea.vmem %s0, %s146
      %p148 = scmp.lt.s32.totalorder %s13, 1
      %s149 = scalar_select %p148, %s13, 1
      %s150 = smul.addr %s149, 8
      %s151 = scalar_lea.vmem %s1, %s150
      %p152 = scmp.lt.s32.totalorder %s13, 1
      %s153 = scalar_select %p152, %s13, 1
      %s154 = smul.addr %s153, 8
      %s155 = scalar_lea.vmem %s2, %s154
      %v156 = vld [vmem:[%s147] sm:$0xff]
      %v157 = vld [vmem:[%s151] sm:$0xff]
      %vm158 = vcmp.gt.f32.partialorder %v157, 0.0
      %v159 = vsub.f32 1.0, %v156
      %v160 = vsel %vm158, %v156, %v159
      %v161 = vlog2.pop %v160
      %v162 = vmul.f32 %v161, 0.6931472
      %v163 = vmax.f32 %v162, -100.0
      %v164 = vsub.f32 0.0, %v163
      %v165 = vadd.f32 %v164, 0.0
      %v166 = vadd.f32 %v165, 0.0
      %167 = vst [vmem:[%s155] sm:$0xff] %v166
      %p168 = scmp.lt.s32.totalorder %s13, 1
      %s169 = scalar_select %p168, %s13, 1
      %s170 = smul.addr %s169, 8
      %s171 = scalar_lea.vmem %s2, %s170
      // Predicated region
      $region29: #{_pallas_loss_mean.1} parent=27 // pred_check
        %p172 = pneg %p83
      $region30: #{_pallas_loss_mean.1} parent=27 // pred_check_branch
        %174 = sbr.rel (%p172) target = $region32
      $region31: #{_pallas_loss_mean.1} parent=27 // pred_region
        _
      $region32: #{_pallas_loss_mean.1} parent=27 // pred_fallthru
        _
    $region28: #{_pallas_loss_mean.1} parent=5 // pred_fallthru
      _
    %p175 = scmp.le.s32.totalorder 2, %s8
    // Predicated region
    $region33: #{_pallas_loss_mean.1} parent=5 // pred_check
      %p176 = pneg %p175
    $region34: #{_pallas_loss_mean.1} parent=5 // pred_check_branch
      %178 = sbr.rel (%p176) target = $region36
    $region35: #{_pallas_loss_mean.1} parent=5 // pred_region
      %s179 = ssub.s32 %s8, 2
      // Predicated region
      $region37: #{_pallas_loss_mean.1} parent=35 // pred_check
        %p180 = pneg %p89
      $region38: #{_pallas_loss_mean.1} parent=35 // pred_check_branch
        %182 = sbr.rel (%p180) target = $region40
      $region39: #{_pallas_loss_mean.1} parent=35 // pred_region
        %p183 = scmp.lt.s32.totalorder %s14, 1
        %s184 = scalar_select %p183, %s14, 1
        %s185 = smul.addr %s184, 8
        %s186 = scalar_lea.vmem %s2, %s185
      $region40: #{_pallas_loss_mean.1} parent=35 // pred_fallthru
        _
    $region36: #{_pallas_loss_mean.1} parent=5 // pred_fallthru
      _
  $region6: #{_pallas_loss_mean.1} parent=0 // loop_footer
    %s12 = sadd.s32 1, %s8
  $region7: #{_pallas_loss_mean.1} parent=0 // loop_footer_branch
    %7 = sbr.rel target = $region3
  $region8: #{_pallas_loss_mean.1} parent=0 // loop_exit
    _

</llo_original>
